<compile_context>
chip_gen: v7x
topology: tpu7x:2x2x1
jax: 0.10.0
libtpu: 0.0.40
codegen_flags: <defaults>
</compile_context>

<pallas_src>
import functools

import jax
import jax.numpy as jnp
from jax.experimental import pallas as pl
from jax.experimental.pallas import tpu as pltpu

EPS = 1e-10


def _round_up(x, m):
    return ((x + m - 1) // m) * m


def nalu_kernel(x_ref, wg_ref, o_ref, *, out_p):
    # x tile: (TB, in_dim); wg: (in_dim, 2*out_p) = [W^T | G^T] in the matmul dtype.
    x = x_ref[...]
    x_f32 = x.astype(jnp.float32)
    wg = wg_ref[...]

    # Single MXU pass for additive path + gate logits (lane-dense result).
    aw = jnp.dot(x.astype(wg.dtype), wg, preferred_element_type=jnp.float32)
    a = aw[:, :out_p]
    g = jax.nn.sigmoid(aw[:, out_p:])

    # Multiplicative path: log stays f32 (eps=1e-10 not representable in bf16),
    # GEMM runs in the weights' dtype with f32 accumulation. W is the
    # lane-aligned left half of the fused resident weight operand.
    log_x = jnp.log(jnp.abs(x_f32) + EPS)
    m = jnp.exp(jnp.dot(log_x.astype(wg.dtype), wg[:, :out_p],
                        preferred_element_type=jnp.float32))

    o_ref[...] = (g * a + (1.0 - g) * m).astype(o_ref.dtype)


def nalu_forward(x, G, W_hat, M_hat, *, block_b=512, use_bf16_matmul=True,
                 vmem_limit_bytes=48 * 1024 * 1024):
    """x: (B, in_dim); G, W_hat, M_hat: (out_dim, in_dim). Returns (B, out_dim) f32."""
    B, in_dim = x.shape
    out_dim = G.shape[0]

    # --- Batch-invariant weight prep (hoisted out of the kernel) ------------
    W = jnp.tanh(W_hat.astype(jnp.float32)) * jax.nn.sigmoid(M_hat.astype(jnp.float32))

    out_p = _round_up(out_dim, 128)
    mm_dtype = jnp.bfloat16 if use_bf16_matmul else jnp.float32

    # Fused, pre-transposed [W^T | G^T]; only the (cheap) weight matrices are
    # zero-padded on out_dim so the MXU output / stores are lane-dense. The
    # zero columns are exact for both the linear and the log path.
    WG = jnp.zeros((in_dim, 2 * out_p), mm_dtype)
    WG = WG.at[:, :out_dim].set(W.T.astype(mm_dtype))
    WG = WG.at[:, out_p:out_p + out_dim].set(G.T.astype(mm_dtype))

    # --- Balanced batch tiling (over-padding < 8 rows) -----------------------
    block_b = max(8, _round_up(block_b, 8))        # defensive (8,128) sublane rule
    n_tiles = pl.cdiv(B, block_b)
    TB = _round_up(pl.cdiv(B, n_tiles), 8)
    B_p = n_tiles * TB
    if B_p != B:
        x_in = jnp.zeros((B_p, in_dim), x.dtype).at[:B].set(x)
    else:
        x_in = x   # no wrapper-side copy of the dominant HBM stream

    kernel = functools.partial(nalu_kernel, out_p=out_p)

    out_padded = pl.pallas_call(
        kernel,
        out_shape=jax.ShapeDtypeStruct((B_p, out_p), jnp.float32),
        grid=(n_tiles,),
        in_specs=[
            # x tile: pipelined over batch; last dim = full array extent, so
            # no feature padding / extra HBM copy is required.
            pl.BlockSpec((TB, in_dim), lambda i: (i, 0)),
            # Resident fused weights: whole array placed in VMEM once
            # (single buffer, no per-iteration DMA).
            pl.BlockSpec(memory_space=pltpu.MemorySpace.VMEM),
        ],
        out_specs=pl.BlockSpec((TB, out_p), lambda i: (i, 0)),   # lane-dense store
        compiler_params=pltpu.CompilerParams(
            dimension_semantics=("parallel",),
            vmem_limit_bytes=vmem_limit_bytes,
        ),
    )(x_in, WG)

    out = out_padded
    if out_p != out_dim:
        out = out[:, :out_dim]
    if B_p != B:
        out = out[:B]
    return out


def nalu_reference(x, G, W_hat, M_hat):
    W = jnp.tanh(W_hat) * jax.nn.sigmoid(M_hat)
    a = x @ W.T
    g = jax.nn.sigmoid(x @ G.T)
    m = jnp.exp(jnp.log(jnp.abs(x) + EPS) @ W.T)
    return g * a + (1.0 - g) * m


if __name__ == "__main__":
    # Small shapes consistent with the module: batch=8, in_dim=64, out_dim=32.
    B, in_dim, out_dim = 8, 64, 32
    key = jax.random.PRNGKey(0)
    kx, kg, kw, km = jax.random.split(key, 4)

    # kaiming_uniform_(a=sqrt(5)) equivalent: U(-1/sqrt(fan_in), 1/sqrt(fan_in))
    bound = 1.0 / jnp.sqrt(jnp.float32(in_dim))
    G = jax.random.uniform(kg, (out_dim, in_dim), jnp.float32, -bound, bound)
    W_hat = jax.random.uniform(kw, (out_dim, in_dim), jnp.float32, -bound, bound)
    M_hat = jax.random.uniform(km, (out_dim, in_dim), jnp.float32, -bound, bound)

    x = jax.random.normal(kx, (B, in_dim), jnp.float32)

    ref = nalu_reference(x, G, W_hat, M_hat)

    # f32 path: matches the reference tightly.
    out_f32 = jax.block_until_ready(
        nalu_forward(x, G, W_hat, M_hat, use_bf16_matmul=False))
    assert out_f32.shape == (B, out_dim)
    assert jnp.allclose(out_f32, ref, atol=1e-4, rtol=1e-4), "f32 mismatch vs reference"

    # bf16 MXU path (additive + gate + log GEMM in bf16, f32 accumulation):
    # log-domain error is exponentiated, so use a slightly looser tolerance.
    out_bf16 = jax.block_until_ready(
        nalu_forward(x, G, W_hat, M_hat, use_bf16_matmul=True))
    assert out_bf16.shape == (B, out_dim)
    assert jnp.allclose(out_bf16, ref, atol=5e-2, rtol=5e-2), "bf16 mismatch vs reference"

    print("KERNEL_OK")
</pallas_src>

<mosaic_0001>
module attributes {stable_mosaic.version = 11 : i64} {
  func.func @nalu_kernel(%arg0: i32, %arg1: memref<8x64xf32, #tpu.memory_space<vmem>>, %arg2: memref<64x256xf32, #tpu.memory_space<vmem>>, %arg3: memref<8x128xf32, #tpu.memory_space<vmem>>) attributes {dimension_semantics = [#tpu.dimension_semantics<parallel>], iteration_bounds = array<i64: 1>, scalar_prefetch = 0 : i64, scratch_operands = 0 : i64, tpu.core_type = #tpu.core_type<tc>, window_params = [{transform_indices = @transform_0, window_bounds = array<i64: 8, 64>}, {pipeline_mode = #tpu.pipeline_mode<synchronous>, transform_indices = @transform_1, window_bounds = array<i64: 64, 256>}, {transform_indices = @transform_2, window_bounds = array<i64: 8, 128>}]} {
    %c0 = arith.constant 0 : index
    %c0_0 = arith.constant 0 : index
    %0 = vector.load %arg1[%c0, %c0_0] : memref<8x64xf32, #tpu.memory_space<vmem>>, vector<8x64xf32>
    %c0_1 = arith.constant 0 : index
    %c0_2 = arith.constant 0 : index
    %1 = vector.load %arg2[%c0_1, %c0_2] : memref<64x256xf32, #tpu.memory_space<vmem>>, vector<64x256xf32>
    %cst = arith.constant dense<0.000000e+00> : vector<8x256xf32>
    %2 = tpu.matmul %0, %1, %cst {dimension_numbers = #tpu.dot_dimension_numbers<[1], [0], [0], [1], [0, 0, 1, 1], [], []>} : vector<8x64xf32>, vector<64x256xf32>, vector<8x256xf32> -> vector<8x256xf32>
    %3 = vector.extract_strided_slice %2 {offsets = [0, 0], sizes = [8, 128], strides = [1, 1]} : vector<8x256xf32> to vector<8x128xf32>
    %4 = vector.extract_strided_slice %2 {offsets = [0, 128], sizes = [8, 128], strides = [1, 1]} : vector<8x256xf32> to vector<8x128xf32>
    %5 = arith.negf %4 : vector<8x128xf32>
    %6 = math.exp %5 : vector<8x128xf32>
    %cst_3 = arith.constant 1.000000e+00 : f32
    %7 = vector.broadcast %cst_3 : f32 to vector<8x128xf32>
    %8 = arith.addf %7, %6 : vector<8x128xf32>
    %9 = arith.divf %7, %8 : vector<8x128xf32>
    %10 = math.absf %0 : vector<8x64xf32>
    %cst_4 = arith.constant 1.000000e-10 : f32
    %11 = vector.broadcast %cst_4 : f32 to vector<8x64xf32>
    %12 = arith.addf %10, %11 : vector<8x64xf32>
    %13 = math.log %12 : vector<8x64xf32>
    %14 = vector.extract_strided_slice %1 {offsets = [0, 0], sizes = [64, 128], strides = [1, 1]} : vector<64x256xf32> to vector<64x128xf32>
    %cst_5 = arith.constant dense<0.000000e+00> : vector<8x128xf32>
    %15 = tpu.matmul %13, %14, %cst_5 {dimension_numbers = #tpu.dot_dimension_numbers<[1], [0], [0], [1], [0, 0, 1, 1], [], []>} : vector<8x64xf32>, vector<64x128xf32>, vector<8x128xf32> -> vector<8x128xf32>
    %16 = math.exp %15 : vector<8x128xf32>
    %17 = arith.mulf %9, %3 : vector<8x128xf32>
    %cst_6 = arith.constant 1.000000e+00 : f32
    %18 = vector.broadcast %cst_6 : f32 to vector<8x128xf32>
    %19 = arith.subf %18, %9 : vector<8x128xf32>
    %20 = arith.mulf %19, %16 : vector<8x128xf32>
    %21 = arith.addf %17, %20 : vector<8x128xf32>
    %c0_7 = arith.constant 0 : index
    %c0_8 = arith.constant 0 : index
    %22 = vector.load %arg3[%c0_7, %c0_8] : memref<8x128xf32, #tpu.memory_space<vmem>>, vector<8x128xf32>
    tpu.vector_store %arg3[%c0_7, %c0_8], %21 {strides = array<i32>} : memref<8x128xf32, #tpu.memory_space<vmem>>, vector<8x128xf32>,
    return
  }
  func.func @transform_0(%arg0: i32) -> (i32, i32) {
    %c0_i32 = arith.constant 0 : i32
    %c0_i32_0 = arith.constant 0 : i32
    return %arg0, %c0_i32 : i32, i32
  }
  func.func @transform_1(%arg0: i32) -> (i32, i32) {
    %c0_i32 = arith.constant 0 : i32
    %c0_i32_0 = arith.constant 0 : i32
    %c0_i32_1 = arith.constant 0 : i32
    return %c0_i32, %c0_i32_0 : i32, i32
  }
  func.func @transform_2(%arg0: i32) -> (i32, i32) {
    %c0_i32 = arith.constant 0 : i32
    %c0_i32_0 = arith.constant 0 : i32
    return %arg0, %c0_i32 : i32, i32
  }
}

</mosaic_0001>

<llo_original>
// kernel: tpu_custom_call.1
$region0: #{tpu_custom_call.1}
  #allocation0 [shape = 'u32[]', space=smem, size = 0x4, offset = 0x4, fixed_abs, tag = 'smem constant byte address 0x4 - core index']
  #allocation1 [shape = 'u32[144,128]{1,0:T(1,128)}', space=vmem, size = 0x12000, scoped, tag = 'internal scratch']
  %s0 = inlined_call_operand.hbm [shape: f32[8,64], index: 0, kind: input, shape index: {}]
  %s1 = inlined_call_operand.hbm [shape: f32[64,256], index: 1, kind: input, shape index: {}]
  %s2 = inlined_call_operand.hbm [shape: f32[8,128], index: 2, kind: output, shape index: {}]
  %s3 = sld [smem:[#allocation0]]
  $region26: #{tpu_custom_call.1} parent=0
    _
  %s5 = ssub.s32 1, %s3
  %s6 = scalar_select 0, %s5, %s3
  $region1: #{tpu_custom_call.1} parent=0
    #allocation2 [shape = 'u8[4096]{0}', space=vmem, size = 0x1000, scoped, tag = 'input window, operand 0, single buffered']
    #allocation3 [shape = 's32[1]{0}', space=sflag, size = 0x4, scoped, tag = 'scoped memory for tpu_custom_call.1']
    #allocation4 [shape = 's32[1]{0}', space=sflag, size = 0x4, scoped, tag = 'scoped memory for tpu_custom_call.1']
    #allocation5 [shape = 'u8[65536]{0}', space=vmem, size = 0x10000, scoped, tag = 'input window, operand 1, single buffered']
    #allocation6 [shape = 's32[1]{0}', space=sflag, size = 0x4, scoped, tag = 'scoped memory for tpu_custom_call.1']
    #allocation7 [shape = 'u8[4096]{0}', space=vmem, size = 0x1000, scoped, tag = 'output window, operand 0, single buffered']
    %7 = vsyncpa [#allocation3], 0
    %8 = vsyncpa [#allocation6], 0
    %9 = vsyncpa [#allocation4], 0
    // Predicated region
    $region2: #{tpu_custom_call.1} parent=1 // pred_check
      _
    $region3: #{tpu_custom_call.1} parent=1 // pred_check_branch
      %11 = sbr.rel (0) target = $region5
    $region4: #{tpu_custom_call.1} parent=1 // pred_region
      %s13 = ssub.s32 128, 128
      %14 = vsyncadd [#allocation3], %s13
      %s16 = sshll.u32 [#allocation2], 4
      %s17 = int_to_ptr.vmem [resolvable:$true] %s16
      %19 = dma.hbm_to_vmem [thread:$0]  %s0, 128, %s17, [#allocation3]
    $region5: #{tpu_custom_call.1} parent=1 // pred_fallthru
      _
    // Predicated region
    $region6: #{tpu_custom_call.1} parent=1 // pred_check
      _
    $region7: #{tpu_custom_call.1} parent=1 // pred_check_branch
      %21 = sbr.rel (0) target = $region9
    $region8: #{tpu_custom_call.1} parent=1 // pred_region
      %s23 = ssub.s32 2048, 2048
      %24 = vsyncadd [#allocation6], %s23
      %s25 = sshll.u32 [#allocation5], 4
      %s26 = int_to_ptr.vmem [resolvable:$true] %s25
      %31 = dma.hbm_to_vmem [thread:$0]  %s1, 2048, %s26, [#allocation6], 256, 256, 16
    $region9: #{tpu_custom_call.1} parent=1 // pred_fallthru
      _
    // Predicated region
    $region10: #{tpu_custom_call.1} parent=1 // pred_check
      _
    $region11: #{tpu_custom_call.1} parent=1 // pred_check_branch
      %33 = sbr.rel (0) target = $region13
    $region12: #{tpu_custom_call.1} parent=1 // pred_region
      %34 = dma.done [#allocation3], 128
    $region13: #{tpu_custom_call.1} parent=1 // pred_fallthru
      _
    // Predicated region
    $region14: #{tpu_custom_call.1} parent=1 // pred_check
      _
    $region15: #{tpu_custom_call.1} parent=1 // pred_check_branch
      %36 = sbr.rel (0) target = $region17
    $region16: #{tpu_custom_call.1} parent=1 // pred_region
      %37 = dma.done [#allocation6], 2048
    $region17: #{tpu_custom_call.1} parent=1 // pred_fallthru
      _
    %v38 = vld [vmem:[#allocation2] sm:$0xff]
    %v39 = vld [vmem:[#allocation5] sm:$0xff]
    %v40 = vld [vmem:[#allocation5 + $0x8] sm:$0xff]
    %v41 = vld [vmem:[#allocation5 + $0x10] sm:$0xff]
    %v42 = vld [vmem:[#allocation5 + $0x18] sm:$0xff]
    %v43 = vld [vmem:[#allocation5 + $0x20] sm:$0xff]
    %v44 = vld [vmem:[#allocation5 + $0x28] sm:$0xff]
    %v45 = vld [vmem:[#allocation5 + $0x30] sm:$0xff]
    %v46 = vld [vmem:[#allocation5 + $0x38] sm:$0xff]
    %v47 = vld [vmem:[#allocation5 + $0x40] sm:$0xff]
    %v48 = vld [vmem:[#allocation5 + $0x48] sm:$0xff]
    %v49 = vld [vmem:[#allocation5 + $0x50] sm:$0xff]
    %v50 = vld [vmem:[#allocation5 + $0x58] sm:$0xff]
    %v51 = vld [vmem:[#allocation5 + $0x60] sm:$0xff]
    %v52 = vld [vmem:[#allocation5 + $0x68] sm:$0xff]
    %v53 = vld [vmem:[#allocation5 + $0x70] sm:$0xff]
    %v54 = vld [vmem:[#allocation5 + $0x78] sm:$0xff]
    %vm55 = vcmask 523264
    %v57 = vsel %vm55, %v38, 0
    %59 = vmatprep.subr.mxu0 %v40
    %60 = vmatpush1.msra.mxu0 %v39
    %61 = vmatprep.subr.mxu0 %v42
    %62 = vmatpush1.msra.mxu0 %v41
    %63 = vmatprep.subr.mxu0 %v44
    %64 = vmatpush1.msra.mxu0 %v43
    %65 = vmatprep.subr.mxu0 %v46
    %66 = vmatpush1.msra.mxu0 %v45
    %67 = vmatprep.subr.mxu0 %v48
    %68 = vmatpush1.msra.mxu0 %v47
    %69 = vmatprep.subr.mxu0 %v50
    %70 = vmatpush1.msra.mxu0 %v49
    %71 = vmatprep.subr.mxu0 %v52
    %72 = vmatpush1.msra.mxu0 %v51
    %73 = vmatprep.subr.mxu0 %v54
    %74 = vmatpush1.msra.mxu0 %v53
    %75 = vmatprep.subr.mxu0 0.0
    %76 = vmatpush1.msra.mxu0 0.0
    %77 = vmatprep.subr.mxu0 0.0
    %78 = vmatpush1.msra.mxu0 0.0
    %79 = vmatprep.subr.mxu0 0.0
    %80 = vmatpush1.msra.mxu0 0.0
    %81 = vmatprep.subr.mxu0 0.0
    %82 = vmatpush1.msra.mxu0 0.0
    %83 = vmatprep.subr.mxu0 0.0
    %84 = vmatpush1.msra.mxu0 0.0
    %85 = vmatprep.subr.mxu0 0.0
    %86 = vmatpush1.msra.mxu0 0.0
    %87 = vmatprep.subr.mxu0 0.0
    %88 = vmatpush1.msra.mxu0 0.0
    %89 = vmatprep.subr.mxu0 0.0
    %90 = vmatpush1.msra.mxu0 0.0
    %91 = vmatprep.subr.mxu0 0.0
    %92 = vmatpush1.msra.mxu0 0.0
    %93 = vmatprep.subr.mxu0 0.0
    %94 = vmatpush1.msra.mxu0 0.0
    %95 = vmatprep.subr.mxu0 0.0
    %96 = vmatpush1.msra.mxu0 0.0
    %97 = vmatprep.subr.mxu0 0.0
    %98 = vmatpush1.msra.mxu0 0.0
    %99 = vmatprep.subr.mxu0 0.0
    %100 = vmatpush1.msra.mxu0 0.0
    %101 = vmatprep.subr.mxu0 0.0
    %102 = vmatpush1.msra.mxu0 0.0
    %103 = vmatprep.subr.mxu0 0.0
    %104 = vmatpush1.msra.mxu0 0.0
    %105 = vmatprep.subr.mxu0 0.0
    %106 = vmatpush1.msra.mxu0 0.0
    %107 = vmatprep.subr.mxu0 0.0
    %108 = vmatpush1.msra.mxu0 0.0
    %109 = vmatprep.subr.mxu0 0.0
    %110 = vmatpush1.msra.mxu0 0.0
    %111 = vmatprep.subr.mxu0 0.0
    %112 = vmatpush1.msra.mxu0 0.0
    %113 = vmatprep.subr.mxu0 0.0
    %114 = vmatpush1.msra.mxu0 0.0
    %115 = vmatprep.subr.mxu0 0.0
    %116 = vmatpush1.msra.mxu0 0.0
    %117 = vmatprep.subr.mxu0 0.0
    %118 = vmatpush1.msra.mxu0 0.0
    %119 = vmatprep.subr.mxu0 0.0
    %120 = vmatpush1.msra.mxu0 0.0
    %121 = vmatprep.subr.mxu0 0.0
    %122 = vmatpush1.msra.mxu0 0.0
    %123 = vmatprep.mubr.f32.mxu0 0.0
    %124 = vmatmul.mubr.f32.gmra.mrb[0].mxu0 %v57
    %v125 = vpop.f32.mrb[0].mxu0
    %v126 = vadd.f32 0.0, %v125
    %v127 = vpop.f32.mrb[0].mxu0
    %v128 = vadd.f32 0.0, %v127
    %129 = vdwg.mxu0
    %v130 = vxor.u32 %v128, 2147483648
    %v131 = vmul.f32 %v130, 1.442695
    %v132 = vpow.pop %v131
    %v133 = vadd.f32 %v132, 1.0
    %v134 = vrcp.pop %v133
    %v135 = vmul.f32 1.0, %v134
    %v136 = vand.u32 2147483647, %v38
    %v137 = vadd.f32 %v136, 1e-10
    %v138 = vlog2.pop %v137
    %v139 = vmul.f32 %v138, 0.6931472
    %v141 = vsel %vm55, %v139, 0
    %143 = vmatprep.subr.mxu0 0.0
    %144 = vmatpush1.msra.mxu0 %v39
    %145 = vmatprep.subr.mxu0 0.0
    %146 = vmatpush1.msra.mxu0 %v41
    %147 = vmatprep.subr.mxu0 0.0
    %148 = vmatpush1.msra.mxu0 %v43
    %149 = vmatprep.subr.mxu0 0.0
    %150 = vmatpush1.msra.mxu0 %v45
    %151 = vmatprep.subr.mxu0 0.0
    %152 = vmatpush1.msra.mxu0 %v47
    %153 = vmatprep.subr.mxu0 0.0
    %154 = vmatpush1.msra.mxu0 %v49
    %155 = vmatprep.subr.mxu0 0.0
    %156 = vmatpush1.msra.mxu0 %v51
    %157 = vmatprep.subr.mxu0 0.0
    %158 = vmatpush1.msra.mxu0 %v53
    %159 = vmatprep.subr.mxu0 0.0
    %160 = vmatpush1.msra.mxu0 0.0
    %161 = vmatprep.subr.mxu0 0.0
    %162 = vmatpush1.msra.mxu0 0.0
    %163 = vmatprep.subr.mxu0 0.0
    %164 = vmatpush1.msra.mxu0 0.0
    %165 = vmatprep.subr.mxu0 0.0
    %166 = vmatpush1.msra.mxu0 0.0
    %167 = vmatprep.subr.mxu0 0.0
    %168 = vmatpush1.msra.mxu0 0.0
    %169 = vmatprep.subr.mxu0 0.0
    %170 = vmatpush1.msra.mxu0 0.0
    %171 = vmatprep.subr.mxu0 0.0
    %172 = vmatpush1.msra.mxu0 0.0
    %173 = vmatprep.subr.mxu0 0.0
    %174 = vmatpush1.msra.mxu0 0.0
    %175 = vmatprep.subr.mxu0 0.0
    %176 = vmatpush1.msra.mxu0 0.0
    %177 = vmatprep.subr.mxu0 0.0
    %178 = vmatpush1.msra.mxu0 0.0
    %179 = vmatprep.subr.mxu0 0.0
    %180 = vmatpush1.msra.mxu0 0.0
    %181 = vmatprep.subr.mxu0 0.0
    %182 = vmatpush1.msra.mxu0 0.0
    %183 = vmatprep.subr.mxu0 0.0
    %184 = vmatpush1.msra.mxu0 0.0
    %185 = vmatprep.subr.mxu0 0.0
    %186 = vmatpush1.msra.mxu0 0.0
    %187 = vmatprep.subr.mxu0 0.0
    %188 = vmatpush1.msra.mxu0 0.0
    %189 = vmatprep.subr.mxu0 0.0
    %190 = vmatpush1.msra.mxu0 0.0
    %191 = vmatprep.subr.mxu0 0.0
    %192 = vmatpush1.msra.mxu0 0.0
    %193 = vmatprep.subr.mxu0 0.0
    %194 = vmatpush1.msra.mxu0 0.0
    %195 = vmatprep.subr.mxu0 0.0
    %196 = vmatpush1.msra.mxu0 0.0
    %197 = vmatprep.subr.mxu0 0.0
    %198 = vmatpush1.msra.mxu0 0.0
    %199 = vmatprep.subr.mxu0 0.0
    %200 = vmatpush1.msra.mxu0 0.0
    %201 = vmatprep.subr.mxu0 0.0
    %202 = vmatpush1.msra.mxu0 0.0
    %203 = vmatprep.subr.mxu0 0.0
    %204 = vmatpush1.msra.mxu0 0.0
    %205 = vmatprep.subr.mxu0 0.0
    %206 = vmatpush1.msra.mxu0 0.0
    %207 = vmatprep.mubr.f32.mxu0 0.0
    %208 = vmatmul.mubr.f32.gmra.mrb[0].mxu0 %v141
    %v209 = vpop.f32.mrb[0].mxu0
    %v210 = vadd.f32 0.0, %v209
    %v211 = vpop.f32.mrb[0].mxu0
    %212 = vdwg.mxu0
    %v213 = vmul.f32 %v210, 1.442695
    %v214 = vpow.pop %v213
    %v215 = vmul.f32 %v135, %v126
    %v216 = vsub.f32 1.0, %v135
    %v217 = vmul.f32 %v216, %v214
    %v218 = vadd.f32 %v215, %v217
    %219 = vst [vmem:[#allocation7] sm:$0xff] %v218
    // Predicated region
    $region18: #{tpu_custom_call.1} parent=1 // pred_check
      _
    $region19: #{tpu_custom_call.1} parent=1 // pred_check_branch
      %221 = sbr.rel (0) target = $region21
    $region20: #{tpu_custom_call.1} parent=1 // pred_region
      %s223 = ssub.s32 128, 128
      %224 = vsyncadd [#allocation4], %s223
      %s226 = sshll.u32 [#allocation7], 4
      %s227 = int_to_ptr.vmem [resolvable:$true] %s226
      %229 = dma.vmem_to_hbm [thread:$0]  %s227, 128, %s2, [#allocation4]
    $region21: #{tpu_custom_call.1} parent=1 // pred_fallthru
      _
    // Predicated region
    $region22: #{tpu_custom_call.1} parent=1 // pred_check
      _
    $region23: #{tpu_custom_call.1} parent=1 // pred_check_branch
      %231 = sbr.rel (0) target = $region25
    $region24: #{tpu_custom_call.1} parent=1 // pred_region
      %232 = dma.done [#allocation4], 128
    $region25: #{tpu_custom_call.1} parent=1 // pred_fallthru
      _
    %233 = vsyncpa [#allocation3], 1
    %234 = vsyncpa [#allocation6], 1
    %235 = vsyncpa [#allocation4], 1

</llo_original>
